<compile_context>
chip_gen: v7x
topology: tpu7x:2x2x1
jax: 0.10.0
libtpu: 0.0.40
codegen_flags: <defaults>
</compile_context>

<pallas_src>
import functools

import jax
import jax.numpy as jnp
from jax.experimental import pallas as pl
from jax.experimental.pallas import tpu as pltpu


_MAX_SEL_BYTES = 2 << 20     # cap on the (H*W, S) selection matrix in VMEM
_MAX_VMEM_BYTES = 12 << 20   # keep peak VMEM under every generation's default
_MAX_BN = 32                 # cap on images per block (bounds kernel unroll)


def _shortcut_kernel(x_ref, sel_ref, o_ref, *, bn, c_in, c_out, pad):
    """Fused option-A shortcut for one block of `bn` images.

    x_ref:   (bn * c_in,  H*W)  one lane-dense row per (image, channel)
    sel_ref: (H*W, S)           one-hot: column i*W2+j selects pixel (2i, 2j)
    o_ref:   (bn * c_out, S)    lane-dense output rows, S = H2*W2

    A single MXU matmul performs the stride-2 spatial subsample AND the
    (H2,W2)->S flatten at once (row-independent, so ragged-block padding never
    pollutes valid rows).  Pad bands are zero-filled and the data band is
    stored exactly once.
    """
    s = o_ref.shape[-1]
    sub = jnp.dot(x_ref[...], sel_ref[...],
                  preferred_element_type=jnp.float32).astype(o_ref.dtype)
    if pad > 0:
        zero_band = jnp.zeros((pad, s), dtype=o_ref.dtype)
    for b in range(bn):                       # static unroll, bn <= _MAX_BN
        base = b * c_out
        if pad > 0:
            o_ref[base:base + pad, :] = zero_band
            o_ref[base + pad + c_in:base + c_out, :] = zero_band
        o_ref[base + pad:base + pad + c_in, :] = sub[b * c_in:(b + 1) * c_in, :]


def _pick_batch_block(n, c_in, c_out, bytes_per_img):
    """Images per grid step: ~1 MiB of HBM traffic per block, >=4 steps when
    the total is large, block row counts multiples of 8, bn dividing N."""
    total = n * bytes_per_img
    if total <= (1 << 20) or n == 1:
        return n                                         # single block
    target = max(1, (1 << 20) // max(1, bytes_per_img))  # ~1 MiB per block
    target = min(target, max(1, n // 4), _MAX_BN)        # >= 4 pipeline steps
    cands = [d for d in range(1, min(n, _MAX_BN) + 1)
             if (d * c_in) % 8 == 0 and (d * c_out) % 8 == 0]
    if not cands:
        return n                      # equal-full block is always layout-legal
    divs = [d for d in cands if n % d == 0 and d <= target]
    if divs:
        return max(divs)
    fits = [d for d in cands if d <= target]
    return max(fits) if fits else min(cands)


def lambda_layer(x, planes):
    """JAX/Pallas equivalent of
       LambdaLayer(lambda x: F.pad(x[:, :, ::2, ::2],
                                   (0,0,0,0, planes//4, planes//4), 'constant', 0))
    x: (N, C, H, W).  Returns (N, C + 2*(planes//4), ceil(H/2), ceil(W/2))."""
    n, c, h, w = x.shape
    pad = planes // 4
    h2, w2 = (h + 1) // 2, (w + 1) // 2          # matches PyTorch ::2 (ceil)
    c_out = c + 2 * pad
    s, hw = h2 * w2, h * w
    itemsize = jnp.dtype(x.dtype).itemsize
    sel_bytes = hw * s * itemsize

    fused_ok = (jnp.issubdtype(x.dtype, jnp.floating)
                and sel_bytes <= _MAX_SEL_BYTES)
    bn = n
    if fused_ok:
        bytes_per_img = (c * hw + c_out * s) * itemsize
        bn = _pick_batch_block(n, c, c_out, bytes_per_img)
        vmem_need = 2 * bn * bytes_per_img + 2 * sel_bytes  # double-buffered
        if vmem_need > _MAX_VMEM_BYTES:
            fused_ok = False

    if not fused_ok:
        # TODO(synk): non-floating dtypes / spatial sizes too large for an
        # in-VMEM selection matrix fall back to the XLA-native pad.
        return jnp.pad(x[:, :, ::2, ::2],
                       ((0, 0), (pad, pad), (0, 0), (0, 0)))

    # One-hot selection matrix: column q = i*W2 + j picks flat pixel 2i*W + 2j.
    cols = jnp.arange(s, dtype=jnp.int32)
    wanted = 2 * (cols // w2) * w + 2 * (cols % w2)            # (S,)
    sel = (jnp.arange(hw, dtype=jnp.int32)[:, None] == wanted[None, :]
           ).astype(x.dtype)                                   # (H*W, S)

    x2 = x.reshape(n * c, hw)                 # pure-metadata reshape (free)
    grid_n = pl.cdiv(n, bn)
    kernel = functools.partial(_shortcut_kernel,
                               bn=bn, c_in=c, c_out=c_out, pad=pad)

    out2 = pl.pallas_call(
        kernel,
        out_shape=jax.ShapeDtypeStruct((n * c_out, s), x.dtype),
        grid=(grid_n,),
        in_specs=[
            pl.BlockSpec((bn * c, hw), lambda i: (i, 0)),
            pl.BlockSpec((hw, s), lambda i: (0, 0)),   # fetched once (constant)
        ],
        out_specs=pl.BlockSpec((bn * c_out, s), lambda i: (i, 0)),
        compiler_params=pltpu.CompilerParams(
            dimension_semantics=("parallel",),
        ),
        cost_estimate=pl.CostEstimate(
            flops=2 * n * c * hw * s,
            transcendentals=0,
            bytes_accessed=(n * c * hw + n * c_out * s) * itemsize + sel_bytes),
    )(x2, sel)

    return out2.reshape(n, c_out, h2, w2)     # pure-metadata reshape (free)


if __name__ == "__main__":
    key = jax.random.PRNGKey(0)
    # small shapes consistent with a CIFAR ResNet option-A shortcut:
    # in_planes = 4, planes = 8 -> pad = 2 channels each side, spatial 16 -> 8
    N, C, H, W = 2, 4, 16, 16
    planes = 8

    x = jax.random.normal(key, (N, C, H, W), dtype=jnp.float32)

    out = lambda_layer(x, planes)
    out = jax.block_until_ready(out)

    # pure-JAX reference of the same lambda
    pad = planes // 4
    ref = jnp.pad(x[:, :, ::2, ::2], ((0, 0), (pad, pad), (0, 0), (0, 0)))

    assert out.shape == (N, C + 2 * pad, H // 2, W // 2), out.shape
    assert out.dtype == x.dtype
    assert jnp.allclose(out, ref, atol=1e-6, rtol=1e-6), "mismatch vs reference"

    print("KERNEL_OK")
</pallas_src>

<mosaic_0001>
module attributes {stable_mosaic.version = 11 : i64} {
  func.func @_shortcut_kernel(%arg0: i32, %arg1: memref<8x256xf32, #tpu.memory_space<vmem>>, %arg2: memref<256x64xf32, #tpu.memory_space<vmem>>, %arg3: memref<16x64xf32, #tpu.memory_space<vmem>>) attributes {dimension_semantics = [#tpu.dimension_semantics<parallel>], iteration_bounds = array<i64: 1>, scalar_prefetch = 0 : i64, scratch_operands = 0 : i64, tpu.core_type = #tpu.core_type<tc>, window_params = [{transform_indices = @transform_0, window_bounds = array<i64: 8, 256>}, {pipeline_mode = #tpu.pipeline_mode<synchronous>, transform_indices = @transform_1, window_bounds = array<i64: 256, 64>}, {transform_indices = @transform_2, window_bounds = array<i64: 16, 64>}]} {
    %c0 = arith.constant 0 : index
    %c0_0 = arith.constant 0 : index
    %0 = vector.load %arg1[%c0, %c0_0] : memref<8x256xf32, #tpu.memory_space<vmem>>, vector<8x256xf32>
    %c0_1 = arith.constant 0 : index
    %c0_2 = arith.constant 0 : index
    %1 = vector.load %arg2[%c0_1, %c0_2] : memref<256x64xf32, #tpu.memory_space<vmem>>, vector<256x64xf32>
    %cst = arith.constant dense<0.000000e+00> : vector<8x64xf32>
    %2 = tpu.matmul %0, %1, %cst {dimension_numbers = #tpu.dot_dimension_numbers<[1], [0], [0], [1], [0, 0, 1, 1], [], []>} : vector<8x256xf32>, vector<256x64xf32>, vector<8x64xf32> -> vector<8x64xf32>
    %cst_3 = arith.constant 0.000000e+00 : f32
    %3 = vector.broadcast %cst_3 : f32 to vector<2x64xf32>
    %c0_4 = arith.constant 0 : index
    %c0_5 = arith.constant 0 : index
    %4 = vector.load %arg3[%c0_4, %c0_5] : memref<16x64xf32, #tpu.memory_space<vmem>>, vector<2x64xf32>
    tpu.vector_store %arg3[%c0_4, %c0_5], %3 {strides = array<i32>} : memref<16x64xf32, #tpu.memory_space<vmem>>, vector<2x64xf32>,
    %c6 = arith.constant 6 : index
    %c0_6 = arith.constant 0 : index
    %5 = vector.load %arg3[%c6, %c0_6] : memref<16x64xf32, #tpu.memory_space<vmem>>, vector<2x64xf32>
    tpu.vector_store %arg3[%c6, %c0_6], %3 {strides = array<i32>} : memref<16x64xf32, #tpu.memory_space<vmem>>, vector<2x64xf32>,
    %6 = vector.extract_strided_slice %2 {offsets = [0, 0], sizes = [4, 64], strides = [1, 1]} : vector<8x64xf32> to vector<4x64xf32>
    %c2 = arith.constant 2 : index
    %c0_7 = arith.constant 0 : index
    %7 = vector.load %arg3[%c2, %c0_7] : memref<16x64xf32, #tpu.memory_space<vmem>>, vector<4x64xf32>
    tpu.vector_store %arg3[%c2, %c0_7], %6 {strides = array<i32>} : memref<16x64xf32, #tpu.memory_space<vmem>>, vector<4x64xf32>,
    %c8 = arith.constant 8 : index
    %c0_8 = arith.constant 0 : index
    %8 = vector.load %arg3[%c8, %c0_8] : memref<16x64xf32, #tpu.memory_space<vmem>>, vector<2x64xf32>
    tpu.vector_store %arg3[%c8, %c0_8], %3 {strides = array<i32>} : memref<16x64xf32, #tpu.memory_space<vmem>>, vector<2x64xf32>,
    %c14 = arith.constant 14 : index
    %c0_9 = arith.constant 0 : index
    %9 = vector.load %arg3[%c14, %c0_9] : memref<16x64xf32, #tpu.memory_space<vmem>>, vector<2x64xf32>
    tpu.vector_store %arg3[%c14, %c0_9], %3 {strides = array<i32>} : memref<16x64xf32, #tpu.memory_space<vmem>>, vector<2x64xf32>,
    %10 = vector.extract_strided_slice %2 {offsets = [4, 0], sizes = [4, 64], strides = [1, 1]} : vector<8x64xf32> to vector<4x64xf32>
    %c10 = arith.constant 10 : index
    %c0_10 = arith.constant 0 : index
    %11 = vector.load %arg3[%c10, %c0_10] : memref<16x64xf32, #tpu.memory_space<vmem>>, vector<4x64xf32>
    tpu.vector_store %arg3[%c10, %c0_10], %10 {strides = array<i32>} : memref<16x64xf32, #tpu.memory_space<vmem>>, vector<4x64xf32>,
    return
  }
  func.func @transform_0(%arg0: i32) -> (i32, i32) {
    %c0_i32 = arith.constant 0 : i32
    %c0_i32_0 = arith.constant 0 : i32
    return %arg0, %c0_i32 : i32, i32
  }
  func.func @transform_1(%arg0: i32) -> (i32, i32) {
    %c0_i32 = arith.constant 0 : i32
    %c0_i32_0 = arith.constant 0 : i32
    %c0_i32_1 = arith.constant 0 : i32
    return %c0_i32, %c0_i32_0 : i32, i32
  }
  func.func @transform_2(%arg0: i32) -> (i32, i32) {
    %c0_i32 = arith.constant 0 : i32
    %c0_i32_0 = arith.constant 0 : i32
    return %arg0, %c0_i32 : i32, i32
  }
}

</mosaic_0001>

<llo_original>
// kernel: tpu_custom_call.1
$region0: #{tpu_custom_call.1}
  #allocation0 [shape = 'u32[]', space=smem, size = 0x4, offset = 0x4, fixed_abs, tag = 'smem constant byte address 0x4 - core index']
  #allocation1 [shape = 'u32[144,128]{1,0:T(1,128)}', space=vmem, size = 0x12000, scoped, tag = 'internal scratch']
  %s0 = inlined_call_operand.vmem [shape: f32[8,256], index: 0, kind: input, shape index: {}]
  %s1 = inlined_call_operand.vmem [shape: f32[256,64], index: 1, kind: input, shape index: {}]
  %s2 = inlined_call_operand.hbm [shape: f32[16,64], index: 2, kind: output, shape index: {}]
  %s3 = sld [smem:[#allocation0]]
  $region18: #{tpu_custom_call.1} parent=0
    _
  %s5 = ssub.s32 1, %s3
  %s6 = scalar_select 0, %s5, %s3
  $region1: #{tpu_custom_call.1} parent=0
    #allocation2 [shape = 'u8[8192]{0}', space=vmem, size = 0x2000, scoped, tag = 'output window, operand 0, single buffered']
    #allocation3 [shape = 's32[1]{0}', space=sflag, size = 0x4, scoped, tag = 'scoped memory for tpu_custom_call.1']
    %7 = vsyncpa [#allocation3], 0
    // Predicated region
    $region2: #{tpu_custom_call.1} parent=1 // pred_check
      _
    $region3: #{tpu_custom_call.1} parent=1 // pred_check_branch
      %9 = sbr.rel (0) target = $region5
    $region4: #{tpu_custom_call.1} parent=1 // pred_region
      _
    $region5: #{tpu_custom_call.1} parent=1 // pred_fallthru
      _
    // Predicated region
    $region6: #{tpu_custom_call.1} parent=1 // pred_check
      _
    $region7: #{tpu_custom_call.1} parent=1 // pred_check_branch
      %11 = sbr.rel (0) target = $region9
    $region8: #{tpu_custom_call.1} parent=1 // pred_region
      _
    $region9: #{tpu_custom_call.1} parent=1 // pred_fallthru
      _
    %v12 = vld [vmem:[%s0] sm:$0xff]
    %v13 = vld [vmem:[%s0 + $0x8] sm:$0xff]
    %v14 = vld [vmem:[%s1] sm:$0xff]
    %v15 = vld [vmem:[%s1 + $0x8] sm:$0xff]
    %v16 = vld [vmem:[%s1 + $0x10] sm:$0xff]
    %v17 = vld [vmem:[%s1 + $0x18] sm:$0xff]
    %v18 = vld [vmem:[%s1 + $0x20] sm:$0xff]
    %v19 = vld [vmem:[%s1 + $0x28] sm:$0xff]
    %v20 = vld [vmem:[%s1 + $0x30] sm:$0xff]
    %v21 = vld [vmem:[%s1 + $0x38] sm:$0xff]
    %v22 = vld [vmem:[%s1 + $0x40] sm:$0xff]
    %v23 = vld [vmem:[%s1 + $0x48] sm:$0xff]
    %v24 = vld [vmem:[%s1 + $0x50] sm:$0xff]
    %v25 = vld [vmem:[%s1 + $0x58] sm:$0xff]
    %v26 = vld [vmem:[%s1 + $0x60] sm:$0xff]
    %v27 = vld [vmem:[%s1 + $0x68] sm:$0xff]
    %v28 = vld [vmem:[%s1 + $0x70] sm:$0xff]
    %v29 = vld [vmem:[%s1 + $0x78] sm:$0xff]
    %v30 = vld [vmem:[%s1 + $0x80] sm:$0xff]
    %v31 = vld [vmem:[%s1 + $0x88] sm:$0xff]
    %v32 = vld [vmem:[%s1 + $0x90] sm:$0xff]
    %v33 = vld [vmem:[%s1 + $0x98] sm:$0xff]
    %v34 = vld [vmem:[%s1 + $0xa0] sm:$0xff]
    %v35 = vld [vmem:[%s1 + $0xa8] sm:$0xff]
    %v36 = vld [vmem:[%s1 + $0xb0] sm:$0xff]
    %v37 = vld [vmem:[%s1 + $0xb8] sm:$0xff]
    %v38 = vld [vmem:[%s1 + $0xc0] sm:$0xff]
    %v39 = vld [vmem:[%s1 + $0xc8] sm:$0xff]
    %v40 = vld [vmem:[%s1 + $0xd0] sm:$0xff]
    %v41 = vld [vmem:[%s1 + $0xd8] sm:$0xff]
    %v42 = vld [vmem:[%s1 + $0xe0] sm:$0xff]
    %v43 = vld [vmem:[%s1 + $0xe8] sm:$0xff]
    %v44 = vld [vmem:[%s1 + $0xf0] sm:$0xff]
    %v45 = vld [vmem:[%s1 + $0xf8] sm:$0xff]
    %46 = vmatprep.subr.mxu0 0.0
    %47 = vmatpush1.msra.mxu0 %v14
    %48 = vmatprep.subr.mxu0 0.0
    %49 = vmatpush1.msra.mxu0 %v15
    %50 = vmatprep.subr.mxu0 0.0
    %51 = vmatpush1.msra.mxu0 %v16
    %52 = vmatprep.subr.mxu0 0.0
    %53 = vmatpush1.msra.mxu0 %v17
    %54 = vmatprep.subr.mxu0 0.0
    %55 = vmatpush1.msra.mxu0 %v18
    %56 = vmatprep.subr.mxu0 0.0
    %57 = vmatpush1.msra.mxu0 %v19
    %58 = vmatprep.subr.mxu0 0.0
    %59 = vmatpush1.msra.mxu0 %v20
    %60 = vmatprep.subr.mxu0 0.0
    %61 = vmatpush1.msra.mxu0 %v21
    %62 = vmatprep.subr.mxu0 0.0
    %63 = vmatpush1.msra.mxu0 %v22
    %64 = vmatprep.subr.mxu0 0.0
    %65 = vmatpush1.msra.mxu0 %v23
    %66 = vmatprep.subr.mxu0 0.0
    %67 = vmatpush1.msra.mxu0 %v24
    %68 = vmatprep.subr.mxu0 0.0
    %69 = vmatpush1.msra.mxu0 %v25
    %70 = vmatprep.subr.mxu0 0.0
    %71 = vmatpush1.msra.mxu0 %v26
    %72 = vmatprep.subr.mxu0 0.0
    %73 = vmatpush1.msra.mxu0 %v27
    %74 = vmatprep.subr.mxu0 0.0
    %75 = vmatpush1.msra.mxu0 %v28
    %76 = vmatprep.subr.mxu0 0.0
    %77 = vmatpush1.msra.mxu0 %v29
    %78 = vmatprep.subr.mxu0 0.0
    %79 = vmatpush1.msra.mxu0 %v30
    %80 = vmatprep.subr.mxu0 0.0
    %81 = vmatpush1.msra.mxu0 %v31
    %82 = vmatprep.subr.mxu0 0.0
    %83 = vmatpush1.msra.mxu0 %v32
    %84 = vmatprep.subr.mxu0 0.0
    %85 = vmatpush1.msra.mxu0 %v33
    %86 = vmatprep.subr.mxu0 0.0
    %87 = vmatpush1.msra.mxu0 %v34
    %88 = vmatprep.subr.mxu0 0.0
    %89 = vmatpush1.msra.mxu0 %v35
    %90 = vmatprep.subr.mxu0 0.0
    %91 = vmatpush1.msra.mxu0 %v36
    %92 = vmatprep.subr.mxu0 0.0
    %93 = vmatpush1.msra.mxu0 %v37
    %94 = vmatprep.subr.mxu0 0.0
    %95 = vmatpush1.msra.mxu0 %v38
    %96 = vmatprep.subr.mxu0 0.0
    %97 = vmatpush1.msra.mxu0 %v39
    %98 = vmatprep.subr.mxu0 0.0
    %99 = vmatpush1.msra.mxu0 %v40
    %100 = vmatprep.subr.mxu0 0.0
    %101 = vmatpush1.msra.mxu0 %v41
    %102 = vmatprep.subr.mxu0 0.0
    %103 = vmatpush1.msra.mxu0 %v42
    %104 = vmatprep.subr.mxu0 0.0
    %105 = vmatpush1.msra.mxu0 %v43
    %106 = vmatprep.subr.mxu0 0.0
    %107 = vmatpush1.msra.mxu0 %v44
    %108 = vmatprep.subr.mxu0 0.0
    %109 = vmatpush1.msra.mxu0 %v45
    %110 = vmatprep.mubr.f32.mxu0 %v13
    %111 = vmatmul.mubr.f32.gmra.mrb[0].mxu0 %v12
    %v112 = vpop.f32.mrb[0].mxu0
    %v113 = vadd.f32 0.0, %v112
    %v114 = vpop.f32.mrb[0].mxu0
    %115 = vdwg.mxu0
    %vm116 = vcmask 517120
    %117 = vst.msk [vmem:[#allocation2] sm:$0x3] %vm116, 0.0
    %118 = vst.msk [vmem:[#allocation2 + $0x6] sm:$0x3] %vm116, 0.0
    %vm119 = vcmask 519168
    %120 = vst.msk [vmem:[#allocation2 + $0x2] sm:$0xf] %vm119, %v113
    %121 = vst.msk [vmem:[#allocation2 + $0x8] sm:$0x3] %vm116, 0.0
    %122 = vst.msk [vmem:[#allocation2 + $0xe] sm:$0x3] %vm116, 0.0
    %vm123 = vcmask 523268
    %124 = vst.msk [vmem:[#allocation2 + $0x6] sm:$0xf0] %vm123, %v113
    // Predicated region
    $region10: #{tpu_custom_call.1} parent=1 // pred_check
      _
    $region11: #{tpu_custom_call.1} parent=1 // pred_check_branch
      %126 = sbr.rel (0) target = $region13
    $region12: #{tpu_custom_call.1} parent=1 // pred_region
      %s128 = ssub.s32 256, 256
      %129 = vsyncadd [#allocation3], %s128
      %s130 = sshll.u32 [#allocation2], 4
      %s131 = int_to_ptr.vmem [resolvable:$true] %s130
      %136 = dma.vmem_to_hbm [thread:$0]  %s131, 256, %s2, [#allocation3], 128, 128, 8
    $region13: #{tpu_custom_call.1} parent=1 // pred_fallthru
      _
    // Predicated region
    $region14: #{tpu_custom_call.1} parent=1 // pred_check
      _
    $region15: #{tpu_custom_call.1} parent=1 // pred_check_branch
      %138 = sbr.rel (0) target = $region17
    $region16: #{tpu_custom_call.1} parent=1 // pred_region
      %139 = dma.done [#allocation3], 256
    $region17: #{tpu_custom_call.1} parent=1 // pred_fallthru
      _
    %140 = vsyncpa [#allocation3], 1

</llo_original>
